<compile_context>
chip_gen: v7x
topology: tpu7x:2x2x1
jax: 0.10.0
libtpu: 0.0.40
codegen_flags: <defaults>
</compile_context>

<pallas_src>
from functools import partial

import jax
import jax.numpy as jnp
from jax.experimental import pallas as pl
from jax.experimental.pallas import tpu as pltpu


def _round_up(x: int, m: int) -> int:
    return ((x + m - 1) // m) * m


def _cdiv(a: int, b: int) -> int:
    return -(-a // b)


def _gap_onepass_kernel(x_ref, o_ref, *, inv_s: float):
    # x_ref: (TR, S) full rows; o_ref: (TR, 1).
    s = jnp.sum(x_ref[...], axis=-1, keepdims=True, dtype=jnp.float32)
    o_ref[...] = (s * inv_s).astype(o_ref.dtype)


def _gap_reduce_kernel(x_ref, o_ref, acc_ref, *, inv_s: float, s_total: int, ts: int):
    # x_ref: (TR, TS) spatial tile; acc_ref: (TR, 1) f32; o_ref: (TR, 1).
    k = pl.program_id(1)

    @pl.when(k == 0)
    def _init():
        acc_ref[...] = jnp.zeros_like(acc_ref)

    x = x_ref[...]
    if s_total % ts != 0:
        # Mask the ragged last spatial tile (edge-block contents are unspecified).
        col = jax.lax.broadcasted_iota(jnp.int32, x.shape, 1)
        x = jnp.where(col + k * ts < s_total, x, jnp.zeros_like(x))
    acc_ref[...] += jnp.sum(x, axis=-1, keepdims=True, dtype=jnp.float32)

    @pl.when(k == pl.num_programs(1) - 1)
    def _finalize():
        o_ref[...] = (acc_ref[...] * inv_s).astype(o_ref.dtype)


def fast_global_avg_pool(x, *, buffer_bytes: int = 8 * 1024 * 1024):
    """x: (B, C, H, W) -> (B, C), mean over all spatial positions."""
    B, C, H, W = x.shape
    R = B * C
    S = H * W
    itemsize = jnp.dtype(x.dtype).itemsize
    # Sublane packing multiple: 8 for 4-byte, 16 for bf16, 32 for int8/fp8.
    sub_pack = max(8, 32 // itemsize)
    row_bytes = S * itemsize

    # Free reshape of a contiguous NCHW tensor: rows of (R, S) are contiguous in HBM.
    x2 = x.reshape(R, S)

    rows_fit = buffer_bytes // max(1, row_bytes)
    if rows_fit >= sub_pack:
        # Regime 1: whole rows fit -> single-pass reduce, no S tiling.
        ts, n_s = S, 1
        tr = (rows_fit // sub_pack) * sub_pack
        if tr >= R:
            tr = R
            # Megacore: split rows into 2 parallel blocks when there's real work.
            if R > sub_pack and R * row_bytes >= (2 << 20):
                tr = _round_up(_cdiv(R, 2), sub_pack)
    else:
        # Regime 2: rows are longer than the buffer budget -> tile the spatial axis.
        tr = min(sub_pack, R)
        ts = max(128, (buffer_bytes // max(1, tr * itemsize)) // 128 * 128)
        if ts >= S:
            ts, n_s = S, 1
        else:
            n_s = _cdiv(S, ts)
    n_r = _cdiv(R, tr)

    inv_s = 1.0 / float(S)
    out_struct = jax.ShapeDtypeStruct((R, 1), x.dtype)
    cost = pl.CostEstimate(
        flops=R * S,
        transcendentals=0,
        bytes_accessed=R * S * itemsize + R * itemsize,
    )

    if n_s == 1:
        compiler_params = pltpu.CompilerParams(
            dimension_semantics=("parallel",),
            vmem_limit_bytes=40 * 1024 * 1024,
        )
        out = pl.pallas_call(
            partial(_gap_onepass_kernel, inv_s=inv_s),
            out_shape=out_struct,
            grid_spec=pltpu.PrefetchScalarGridSpec(
                num_scalar_prefetch=0,
                grid=(n_r,),
                in_specs=[pl.BlockSpec((tr, ts), lambda r: (r, 0))],
                out_specs=pl.BlockSpec((tr, 1), lambda r: (r, 0)),
            ),
            compiler_params=compiler_params,
            cost_estimate=cost,
        )(x2)
    else:
        compiler_params = pltpu.CompilerParams(
            dimension_semantics=("parallel", "arbitrary"),
            vmem_limit_bytes=40 * 1024 * 1024,
        )
        out = pl.pallas_call(
            partial(_gap_reduce_kernel, inv_s=inv_s, s_total=S, ts=ts),
            out_shape=out_struct,
            grid_spec=pltpu.PrefetchScalarGridSpec(
                num_scalar_prefetch=0,
                grid=(n_r, n_s),
                in_specs=[pl.BlockSpec((tr, ts), lambda r, k: (r, k))],
                out_specs=pl.BlockSpec((tr, 1), lambda r, k: (r, 0)),
                scratch_shapes=[pltpu.VMEM((tr, 1), jnp.float32)],
            ),
            compiler_params=compiler_params,
            cost_estimate=cost,
        )(x2)

    return out.reshape(B, C)


if __name__ == "__main__":
    keys = jax.random.split(jax.random.PRNGKey(0), 4)

    # Primary test (shapes consistent with the module's forward).
    B, C, H, W = 2, 4, 16, 16
    x = jax.random.normal(keys[0], (B, C, H, W), dtype=jnp.float32)
    y = fast_global_avg_pool(x)
    jax.block_until_ready(y)
    y_ref = x.reshape(B, C, -1).mean(axis=2)
    assert y.shape == (B, C), y.shape
    assert jnp.allclose(y, y_ref, atol=1e-5, rtol=1e-5), "mismatch vs reference"

    # Multi-row-block path with a ragged row edge (R=36, tr=8 -> edge block).
    x2 = jax.random.normal(keys[1], (3, 12, 40, 40), dtype=jnp.float32)
    y2 = fast_global_avg_pool(x2, buffer_bytes=64 * 1024)
    jax.block_until_ready(y2)
    y2_ref = x2.reshape(3, 12, -1).mean(axis=2)
    assert jnp.allclose(y2, y2_ref, atol=1e-5, rtol=1e-5), "mismatch (row blocks)"

    # Tiled-S reduction path with a masked ragged last spatial tile.
    y2b = fast_global_avg_pool(x2, buffer_bytes=16 * 1024)
    jax.block_until_ready(y2b)
    assert jnp.allclose(y2b, y2_ref, atol=1e-5, rtol=1e-5), "mismatch (tiled S)"

    # Small spatial (S < 128, full-extent lane block) + many channels, no padding.
    x3 = jax.random.normal(keys[2], (2, 300, 8, 8), dtype=jnp.float32)
    y3 = fast_global_avg_pool(x3)
    jax.block_until_ready(y3)
    y3_ref = x3.reshape(2, 300, -1).mean(axis=2)
    assert jnp.allclose(y3, y3_ref, atol=1e-5, rtol=1e-5), "mismatch (small S)"

    # Megacore row-split path (>= 2 MiB of work that fits a single buffer).
    x4 = jax.random.normal(keys[3], (2, 64, 64, 64), dtype=jnp.float32)
    y4 = fast_global_avg_pool(x4)
    jax.block_until_ready(y4)
    y4_ref = x4.reshape(2, 64, -1).mean(axis=2)
    assert jnp.allclose(y4, y4_ref, atol=1e-4, rtol=1e-5), "mismatch (row split)"

    print("KERNEL_OK")
</pallas_src>

<mosaic_0001>
module attributes {stable_mosaic.version = 11 : i64} {
  func.func @_gap_onepass_kernel(%arg0: i32, %arg1: memref<8x256xf32, #tpu.memory_space<vmem>>, %arg2: memref<8x1xf32, #tpu.memory_space<vmem>>) attributes {dimension_semantics = [#tpu.dimension_semantics<parallel>], iteration_bounds = array<i64: 1>, scalar_prefetch = 0 : i64, scratch_operands = 0 : i64, tpu.core_type = #tpu.core_type<tc>, window_params = [{transform_indices = @transform_0, window_bounds = array<i64: 8, 256>}, {transform_indices = @transform_1, window_bounds = array<i64: 8, 1>}]} {
    %c0 = arith.constant 0 : index
    %c0_0 = arith.constant 0 : index
    %0 = vector.load %arg1[%c0, %c0_0] : memref<8x256xf32, #tpu.memory_space<vmem>>, vector<8x256xf32>
    %cst = arith.constant dense<0.000000e+00> : vector<8xf32>
    %1 = vector.multi_reduction <add>, %0, %cst [1] : vector<8x256xf32> to vector<8xf32>
    %2 = vector.shape_cast %1 : vector<8xf32> to vector<8x1xf32>
    %cst_1 = arith.constant 3.906250e-03 : f32
    %3 = vector.broadcast %cst_1 : f32 to vector<8x1xf32>
    %4 = arith.mulf %2, %3 : vector<8x1xf32>
    %c0_2 = arith.constant 0 : index
    %c0_3 = arith.constant 0 : index
    %5 = vector.load %arg2[%c0_2, %c0_3] : memref<8x1xf32, #tpu.memory_space<vmem>>, vector<8x1xf32>
    tpu.vector_store %arg2[%c0_2, %c0_3], %4 {strides = array<i32>} : memref<8x1xf32, #tpu.memory_space<vmem>>, vector<8x1xf32>,
    return
  }
  func.func @transform_0(%arg0: i32) -> (i32, i32) {
    %c0_i32 = arith.constant 0 : i32
    %c0_i32_0 = arith.constant 0 : i32
    return %arg0, %c0_i32 : i32, i32
  }
  func.func @transform_1(%arg0: i32) -> (i32, i32) {
    %c0_i32 = arith.constant 0 : i32
    %c0_i32_0 = arith.constant 0 : i32
    return %arg0, %c0_i32 : i32, i32
  }
}

</mosaic_0001>

<llo_original>
// kernel: tpu_custom_call.1
$region0: #{tpu_custom_call.1}
  #allocation0 [shape = 'u32[]', space=smem, size = 0x4, offset = 0x4, fixed_abs, tag = 'smem constant byte address 0x4 - core index']
  #allocation1 [shape = 'u32[144,128]{1,0:T(1,128)}', space=vmem, size = 0x12000, scoped, tag = 'internal scratch']
  %s0 = inlined_call_operand.hbm [shape: f32[8,256], index: 0, kind: input, shape index: {}]
  %s1 = inlined_call_operand.vmem [shape: f32[8,1], index: 1, kind: output, shape index: {}]
  %s2 = sld [smem:[#allocation0]]
  $region18: #{tpu_custom_call.1} parent=0
    _
  %s4 = ssub.s32 1, %s2
  %s5 = scalar_select 0, %s4, %s2
  $region1: #{tpu_custom_call.1} parent=0
    #allocation2 [shape = 'u8[8192]{0}', space=vmem, size = 0x2000, scoped, tag = 'input window, operand 0, single buffered']
    #allocation3 [shape = 's32[1]{0}', space=sflag, size = 0x4, scoped, tag = 'scoped memory for tpu_custom_call.1']
    %6 = vsyncpa [#allocation3], 0
    // Predicated region
    $region2: #{tpu_custom_call.1} parent=1 // pred_check
      _
    $region3: #{tpu_custom_call.1} parent=1 // pred_check_branch
      %8 = sbr.rel (0) target = $region5
    $region4: #{tpu_custom_call.1} parent=1 // pred_region
      %s10 = ssub.s32 256, 256
      %11 = vsyncadd [#allocation3], %s10
      %s13 = sshll.u32 [#allocation2], 4
      %s14 = int_to_ptr.vmem [resolvable:$true] %s13
      %16 = dma.hbm_to_vmem [thread:$0]  %s0, 256, %s14, [#allocation3]
    $region5: #{tpu_custom_call.1} parent=1 // pred_fallthru
      _
    // Predicated region
    $region6: #{tpu_custom_call.1} parent=1 // pred_check
      _
    $region7: #{tpu_custom_call.1} parent=1 // pred_check_branch
      %18 = sbr.rel (0) target = $region9
    $region8: #{tpu_custom_call.1} parent=1 // pred_region
      %19 = dma.done [#allocation3], 256
    $region9: #{tpu_custom_call.1} parent=1 // pred_fallthru
      _
    %v20 = vld [vmem:[#allocation2] sm:$0xff]
    %v21 = vld [vmem:[#allocation2 + $0x8] sm:$0xff]
    %v22 = vadd.f32 %v20, %v21
    %23 = vadd.xlane.f32.xlu0 %v22
    %v24 = vpop.xlane.xlu0 %23
    %v25 = vmul.f32 %v24, 0.00390625
    %vm26 = vcmask 7168
    %27 = vst.msk [vmem:[%s1] sm:$0xff] %vm26, %v25
    // Predicated region
    $region10: #{tpu_custom_call.1} parent=1 // pred_check
      _
    $region11: #{tpu_custom_call.1} parent=1 // pred_check_branch
      %29 = sbr.rel (0) target = $region13
    $region12: #{tpu_custom_call.1} parent=1 // pred_region
      _
    $region13: #{tpu_custom_call.1} parent=1 // pred_fallthru
      _
    // Predicated region
    $region14: #{tpu_custom_call.1} parent=1 // pred_check
      _
    $region15: #{tpu_custom_call.1} parent=1 // pred_check_branch
      %31 = sbr.rel (0) target = $region17
    $region16: #{tpu_custom_call.1} parent=1 // pred_region
      _
    $region17: #{tpu_custom_call.1} parent=1 // pred_fallthru
      _
    %32 = vsyncpa [#allocation3], 1

</llo_original>
